<compile_context>
chip_gen: v6e
topology: v6e:2x2x1
jax: 0.10.0
libtpu: 0.0.40
codegen_flags: <defaults>
</compile_context>

<pallas_src>
import functools

import jax
import jax.numpy as jnp
from jax.experimental import pallas as pl
from jax.experimental.pallas import tpu as pltpu  # noqa: F401  (kept for the tiled TODO variant)

LANE = 128  # vreg lane width (last dim) — output class dim padded to this


def _round_up(n: int, m: int) -> int:
    return ((n + m - 1) // m) * m


def _linear_kernel(x_ref, wt_ref, b_ref, o_ref):
    # x_ref: (B, D) ; wt_ref: (D, Cp) ; b_ref: (1, Cp) ; o_ref: (B, Cp)
    # rhs already in [K, N] layout -> MXU fed directly, no transpose on hot path.
    acc = jnp.dot(x_ref[...], wt_ref[...], preferred_element_type=jnp.float32)
    o_ref[...] = (acc + b_ref[...]).astype(o_ref.dtype)


def prepare_classifier_params(weight, bias):
    """One-time layout prep: transpose W to (D, C) and zero-pad ONLY C to 128.

    weight: (num_classes, input_size)  -- PyTorch nn.Linear layout
    bias:   (num_classes,)
    Returns (wt_padded (D, Cp), bias_padded (1, Cp)).
    Zero padding of the class dim keeps the math exact; D is left unpadded so
    the per-call path needs no activation padding at all.
    """
    C, D = weight.shape
    Cp = _round_up(C, LANE)
    wt = jnp.zeros((D, Cp), weight.dtype).at[:, :C].set(weight.T)
    b = jnp.zeros((1, Cp), bias.dtype).at[0, :C].set(bias)
    return wt, b


@functools.partial(jax.jit, static_argnames=("num_classes",))
def classifier_forward(x, wt_padded, bias_padded, *, num_classes):
    """Pallas equivalent of torch.nn.Linear(input_size, num_classes)(x)."""
    B, D = x.shape
    Dw, Cp = wt_padded.shape
    assert D == Dw, f"input_size mismatch: x has {D}, weight has {Dw}"

    out = pl.pallas_call(
        _linear_kernel,
        out_shape=jax.ShapeDtypeStruct((B, Cp), x.dtype),
        in_specs=[
            pl.BlockSpec((B, D), lambda: (0, 0)),    # activations, full block, unpadded
            pl.BlockSpec((D, Cp), lambda: (0, 0)),   # weight^T, lane-dense rhs
            pl.BlockSpec((1, Cp), lambda: (0, 0)),   # bias row
        ],
        out_specs=pl.BlockSpec((B, Cp), lambda: (0, 0)),  # lane-dense output
    )(x, wt_padded, bias_padded)

    # Slice back to the logical (B, num_classes) result (compiled inside jit).
    return out[:, :num_classes]


if __name__ == "__main__":
    # Small shapes consistent with the module: Linear(input_size=32, num_classes=10)
    batch = 8
    input_size = 32
    num_classes = 10

    key = jax.random.PRNGKey(0)
    kx, kw, kb = jax.random.split(key, 3)

    # Deterministic init matching PyTorch Linear default: U(-1/sqrt(fan_in), 1/sqrt(fan_in))
    bound = 1.0 / (input_size ** 0.5)
    x = jax.random.normal(kx, (batch, input_size), dtype=jnp.float32)
    weight = jax.random.uniform(kw, (num_classes, input_size),
                                minval=-bound, maxval=bound, dtype=jnp.float32)
    bias = jax.random.uniform(kb, (num_classes,),
                              minval=-bound, maxval=bound, dtype=jnp.float32)

    # One-time layout prep (static across inference calls, not on the hot path).
    wt_padded, bias_padded = prepare_classifier_params(weight, bias)

    out = classifier_forward(x, wt_padded, bias_padded, num_classes=num_classes)
    out = jax.block_until_ready(out)

    # Reference check (plain JAX) for correctness.
    ref = x @ weight.T + bias
    assert out.shape == (batch, num_classes)
    assert jnp.allclose(out, ref, atol=1e-5, rtol=1e-5)

    print("KERNEL_OK")
</pallas_src>

<mosaic_0001>
module attributes {stable_mosaic.version = 11 : i64} {
  func.func @_linear_kernel(%arg0: memref<8x32xf32, #tpu.memory_space<vmem>>, %arg1: memref<32x128xf32, #tpu.memory_space<vmem>>, %arg2: memref<1x128xf32, #tpu.memory_space<vmem>>, %arg3: memref<8x128xf32, #tpu.memory_space<vmem>>) attributes {dimension_semantics = [], scalar_prefetch = 0 : i64, scratch_operands = 0 : i64, tpu.core_type = #tpu.core_type<tc>} {
    %c0 = arith.constant 0 : index
    %c0_0 = arith.constant 0 : index
    %0 = vector.load %arg0[%c0, %c0_0] : memref<8x32xf32, #tpu.memory_space<vmem>>, vector<8x32xf32>
    %c0_1 = arith.constant 0 : index
    %c0_2 = arith.constant 0 : index
    %1 = vector.load %arg1[%c0_1, %c0_2] : memref<32x128xf32, #tpu.memory_space<vmem>>, vector<32x128xf32>
    %cst = arith.constant dense<0.000000e+00> : vector<8x128xf32>
    %2 = tpu.matmul %0, %1, %cst {dimension_numbers = #tpu.dot_dimension_numbers<[1], [0], [0], [1], [0, 0, 1, 1], [], []>} : vector<8x32xf32>, vector<32x128xf32>, vector<8x128xf32> -> vector<8x128xf32>
    %c0_3 = arith.constant 0 : index
    %c0_4 = arith.constant 0 : index
    %3 = vector.load %arg2[%c0_3, %c0_4] : memref<1x128xf32, #tpu.memory_space<vmem>>, vector<1x128xf32>
    %4 = vector.broadcast %3 : vector<1x128xf32> to vector<8x128xf32>
    %5 = arith.addf %2, %4 : vector<8x128xf32>
    %c0_5 = arith.constant 0 : index
    %c0_6 = arith.constant 0 : index
    %6 = vector.load %arg3[%c0_5, %c0_6] : memref<8x128xf32, #tpu.memory_space<vmem>>, vector<8x128xf32>
    tpu.vector_store %arg3[%c0_5, %c0_6], %5 {strides = array<i32>} : memref<8x128xf32, #tpu.memory_space<vmem>>, vector<8x128xf32>,
    return
  }
}

</mosaic_0001>

<llo_original>
// kernel: classifier_forward.1
$region0: #{classifier_forward.1}
  #allocation0 [shape = 'u32[]', space=smem, size = 0x4, offset = 0x4, fixed_abs, tag = 'smem constant byte address 0x4 - core index']
  #allocation1 [shape = 'u32[144,128]{1,0:T(1,128)}', space=vmem, size = 0x12000, scoped, tag = 'internal scratch']
  %s0 = inlined_call_operand.hbm [shape: f32[8,32], index: 0, kind: input, shape index: {}]
  %s1 = inlined_call_operand.hbm [shape: f32[32,128], index: 1, kind: input, shape index: {}]
  %s2 = inlined_call_operand.vmem [shape: f32[1,128], index: 2, kind: input, shape index: {}]
  %s3 = inlined_call_operand.hbm [shape: f32[8,128], index: 3, kind: output, shape index: {}]
  %s4 = sld [smem:[#allocation0]]
  $region30: #{classifier_forward.1} parent=0
    _
  %s6 = ssub.s32 1, %s4
  %s7 = scalar_select 0, %s6, %s4
  $region1: #{classifier_forward.1} parent=0
    #allocation2 [shape = 'u8[4096]{0}', space=vmem, size = 0x1000, scoped, tag = 'input window, operand 0, single buffered']
    #allocation3 [shape = 's32[1]{0}', space=sflag, size = 0x4, scoped, tag = 'scoped memory for classifier_forward.1']
    #allocation4 [shape = 's32[1]{0}', space=sflag, size = 0x4, scoped, tag = 'scoped memory for classifier_forward.1']
    #allocation5 [shape = 'u8[16384]{0}', space=vmem, size = 0x4000, scoped, tag = 'input window, operand 1, single buffered']
    #allocation6 [shape = 's32[1]{0}', space=sflag, size = 0x4, scoped, tag = 'scoped memory for classifier_forward.1']
    #allocation7 [shape = 'u8[4096]{0}', space=vmem, size = 0x1000, scoped, tag = 'output window, operand 0, single buffered']
    %8 = vsyncpa [#allocation3], 0
    %9 = vsyncpa [#allocation6], 0
    %10 = vsyncpa [#allocation4], 0
    // Predicated region
    $region2: #{classifier_forward.1} parent=1 // pred_check
      _
    $region3: #{classifier_forward.1} parent=1 // pred_check_branch
      %12 = sbr.rel (0) target = $region5
    $region4: #{classifier_forward.1} parent=1 // pred_region
      %s14 = ssub.s32 128, 128
      %15 = vsyncadd [#allocation3], %s14
      %s17 = sshll.u32 [#allocation2], 4
      %s18 = int_to_ptr.vmem [resolvable:$true] %s17
      %20 = dma.hbm_to_vmem [thread:$0]  %s0, 128, %s18, [#allocation3]
    $region5: #{classifier_forward.1} parent=1 // pred_fallthru
      _
    // Predicated region
    $region6: #{classifier_forward.1} parent=1 // pred_check
      _
    $region7: #{classifier_forward.1} parent=1 // pred_check_branch
      %22 = sbr.rel (0) target = $region9
    $region8: #{classifier_forward.1} parent=1 // pred_region
      %s24 = ssub.s32 512, 512
      %25 = vsyncadd [#allocation6], %s24
      %s26 = sshll.u32 [#allocation5], 4
      %s27 = int_to_ptr.vmem [resolvable:$true] %s26
      %32 = dma.hbm_to_vmem [thread:$0]  %s1, 512, %s27, [#allocation6], 128, 128, 8
    $region9: #{classifier_forward.1} parent=1 // pred_fallthru
      _
    // Predicated region
    $region10: #{classifier_forward.1} parent=1 // pred_check
      _
    $region11: #{classifier_forward.1} parent=1 // pred_check_branch
      %34 = sbr.rel (0) target = $region13
    $region12: #{classifier_forward.1} parent=1 // pred_region
      _
    $region13: #{classifier_forward.1} parent=1 // pred_fallthru
      _
    // Predicated region
    $region14: #{classifier_forward.1} parent=1 // pred_check
      _
    $region15: #{classifier_forward.1} parent=1 // pred_check_branch
      %36 = sbr.rel (0) target = $region17
    $region16: #{classifier_forward.1} parent=1 // pred_region
      %37 = dma.done [#allocation3], 128
    $region17: #{classifier_forward.1} parent=1 // pred_fallthru
      _
    // Predicated region
    $region18: #{classifier_forward.1} parent=1 // pred_check
      _
    $region19: #{classifier_forward.1} parent=1 // pred_check_branch
      %39 = sbr.rel (0) target = $region21
    $region20: #{classifier_forward.1} parent=1 // pred_region
      %40 = dma.done [#allocation6], 512
    $region21: #{classifier_forward.1} parent=1 // pred_fallthru
      _
    %v41 = vld [vmem:[#allocation2] sm:$0xff]
    %v42 = vld [vmem:[#allocation5] sm:$0xff]
    %v43 = vld [vmem:[#allocation5 + $0x8] sm:$0xff]
    %v44 = vld [vmem:[#allocation5 + $0x10] sm:$0xff]
    %v45 = vld [vmem:[#allocation5 + $0x18] sm:$0xff]
    %v46 = vld [vmem:[%s2] sm:$0x1]
    %v48 = vlaneseq
    %v49 = vshrl.u32 %v48, 7
    %v50 = vsub.s32 0, %v49
    %v51 = vrot.slane %v46, %v50
    %vm53 = vcmask 261120
    %v55 = vsel %vm53, %v41, 0
    %57 = vmatprep.subr.mxu0 0.0
    %58 = vmatpush1.msra.mxu0 0.0
    %59 = vmatprep.subr.mxu0 0.0
    %60 = vmatpush1.msra.mxu0 0.0
    %61 = vmatprep.subr.mxu0 0.0
    %62 = vmatpush1.msra.mxu0 0.0
    %63 = vmatprep.subr.mxu0 0.0
    %64 = vmatpush1.msra.mxu0 0.0
    %65 = vmatprep.subr.mxu0 0.0
    %66 = vmatpush1.msra.mxu0 0.0
    %67 = vmatprep.subr.mxu0 0.0
    %68 = vmatpush1.msra.mxu0 0.0
    %69 = vmatprep.subr.mxu0 0.0
    %70 = vmatpush1.msra.mxu0 0.0
    %71 = vmatprep.subr.mxu0 0.0
    %72 = vmatpush1.msra.mxu0 0.0
    %73 = vmatprep.subr.mxu0 0.0
    %74 = vmatpush1.msra.mxu0 0.0
    %75 = vmatprep.subr.mxu0 0.0
    %76 = vmatpush1.msra.mxu0 0.0
    %77 = vmatprep.subr.mxu0 0.0
    %78 = vmatpush1.msra.mxu0 0.0
    %79 = vmatprep.subr.mxu0 0.0
    %80 = vmatpush1.msra.mxu0 0.0
    %81 = vmatprep.subr.mxu0 0.0
    %82 = vmatpush1.msra.mxu0 %v45
    %83 = vmatprep.subr.mxu0 0.0
    %84 = vmatpush1.msra.mxu0 %v44
    %85 = vmatprep.subr.mxu0 0.0
    %86 = vmatpush1.msra.mxu0 %v43
    %87 = vmatprep.subr.mxu0 0.0
    %88 = vmatpush1.msra.mxu0 %v42
    %89 = vmatprep.subr.mxu0 0.0
    %90 = vmatpush2.msra.mxu0 0.0
    %91 = vmatprep.subr.mxu0 0.0
    %92 = vmatpush2.msra.mxu0 0.0
    %93 = vmatprep.subr.mxu0 0.0
    %94 = vmatpush2.msra.mxu0 0.0
    %95 = vmatprep.subr.mxu0 0.0
    %96 = vmatpush2.msra.mxu0 0.0
    %97 = vmatprep.subr.mxu0 0.0
    %98 = vmatpush2.msra.mxu0 0.0
    %99 = vmatprep.subr.mxu0 0.0
    %100 = vmatpush2.msra.mxu0 0.0
    %101 = vmatprep.subr.mxu0 0.0
    %102 = vmatpush2.msra.mxu0 0.0
    %103 = vmatprep.subr.mxu0 0.0
    %104 = vmatpush2.msra.mxu0 0.0
    %105 = vmatprep.subr.mxu0 0.0
    %106 = vmatpush2.msra.mxu0 0.0
    %107 = vmatprep.subr.mxu0 0.0
    %108 = vmatpush2.msra.mxu0 0.0
    %109 = vmatprep.subr.mxu0 0.0
    %110 = vmatpush2.msra.mxu0 0.0
    %111 = vmatprep.subr.mxu0 0.0
    %112 = vmatpush2.msra.mxu0 0.0
    %113 = vmatprep.subr.mxu0 0.0
    %114 = vmatpush2.msra.mxu0 0.0
    %115 = vmatprep.subr.mxu0 0.0
    %116 = vmatpush2.msra.mxu0 0.0
    %117 = vmatprep.subr.mxu0 0.0
    %118 = vmatpush2.msra.mxu0 0.0
    %119 = vmatprep.subr.mxu0 0.0
    %120 = vmatpush2.msra.mxu0 0.0
    %121 = vmatprep.mubr.f32.mxu0 0.0
    %122 = vmatmul.mubr.f32.gmra.mxu0 %v55
    %v123 = vpop.f32.mrf.mxu0
    %v124 = vadd.f32 %v51, %v123
    %v125 = vpop.f32.mrf.mxu0
    %126 = vdwg.mxu0
    %127 = vst [vmem:[#allocation7] sm:$0xff] %v124
    // Predicated region
    $region22: #{classifier_forward.1} parent=1 // pred_check
      _
    $region23: #{classifier_forward.1} parent=1 // pred_check_branch
      %129 = sbr.rel (0) target = $region25
    $region24: #{classifier_forward.1} parent=1 // pred_region
      %s131 = ssub.s32 128, 128
      %132 = vsyncadd [#allocation4], %s131
      %s134 = sshll.u32 [#allocation7], 4
      %s135 = int_to_ptr.vmem [resolvable:$true] %s134
      %137 = dma.vmem_to_hbm [thread:$0]  %s135, 128, %s3, [#allocation4]
    $region25: #{classifier_forward.1} parent=1 // pred_fallthru
      _
    // Predicated region
    $region26: #{classifier_forward.1} parent=1 // pred_check
      _
    $region27: #{classifier_forward.1} parent=1 // pred_check_branch
      %139 = sbr.rel (0) target = $region29
    $region28: #{classifier_forward.1} parent=1 // pred_region
      %140 = dma.done [#allocation4], 128
    $region29: #{classifier_forward.1} parent=1 // pred_fallthru
      _
    %141 = vsyncpa [#allocation3], 1
    %142 = vsyncpa [#allocation6], 1
    %143 = vsyncpa [#allocation4], 1

</llo_original>
